<compile_context>
chip_gen: v5e
topology: v5e:2x2
jax: 0.10.0
libtpu: 0.0.40
codegen_flags: <defaults>
</compile_context>

<pallas_src>
import functools

import jax
import jax.numpy as jnp
from jax.experimental import pallas as pl
from jax.experimental.pallas import tpu as pltpu


def _ceil_to(n, m):
    return ((n + m - 1) // m) * m


def _pad_to(a, shape):
    pads = [(0, t - s) for s, t in zip(a.shape, shape)]
    if any(p for _, p in pads):
        a = jnp.pad(a, pads)
    return a


def _vae_kernel(L, D,
                x_ref, eps_ref,
                w1_ref, b1_ref, wmv_ref, bmv_ref,
                wd_ref, bd_ref, wo_ref, bo_ref,
                out_ref):
    """One batch tile of the fused VAE forward. All weight lane dims are padded
    to multiples of 128; biases are f32; accumulation is always f32."""
    wdt = w1_ref.dtype  # matmul operand dtype (f32 or bf16)

    def mm(a, w_ref):
        if a.dtype != wdt:
            a = a.astype(wdt)
        return jnp.dot(a, w_ref[...], preferred_element_type=jnp.float32)

    x = x_ref[...]

    # ---------------- encoder ----------------
    h = jnp.maximum(mm(x, w1_ref) + b1_ref[...], 0.0)          # [tb, Hp]
    # fused mean|log_var head: one [Hp, Cp] matmul
    y = mm(h, wmv_ref) + bmv_ref[...]                           # [tb, Cp]
    mean = y[:, :L]
    log_var = y[:, L:2 * L]

    # ---------------- reparameterization ----------------
    # TODO(synk): torch.randn_like draws from PyTorch's global RNG; here eps is
    # supplied by the host (jax.random.normal) as a kernel input.
    z = mean + jnp.exp(0.5 * log_var) * eps_ref[...]            # [tb, L]

    # ---------------- decoder ----------------
    hd = jnp.maximum(mm(z, wd_ref) + bd_ref[...], 0.0)          # [tb, Hp]
    logits = mm(hd, wo_ref) + bo_ref[...]                       # [tb, Dp]
    x_hat = jax.nn.sigmoid(logits[:, :D])                       # [tb, D]

    # single lane-packed output slab: [x_hat | mean | log_var]
    out_ref[...] = jnp.concatenate([x_hat, mean, log_var], axis=-1).astype(out_ref.dtype)


def prepare_params(params, *, matmul_dtype=jnp.float32):
    """One-time parameter prep (call once at load time, NOT per forward):
    fuse the mean/log_var heads, zero-pad all lane dims to multiples of 128,
    cast matmul operands (use jnp.bfloat16 on v5e/v6e/v7x for the native MXU
    path and half the resident-weight VMEM); biases stay f32."""
    D, H = params["w1"].shape
    L = params["wm"].shape[1]
    Hp = _ceil_to(H, 128)
    Cp = _ceil_to(2 * L, 128)
    Dp = _ceil_to(D, 128)

    wmv = jnp.concatenate([params["wm"], params["wv"]], axis=1)   # [H, 2L]
    bmv = jnp.concatenate([params["bm"], params["bv"]], axis=1)   # [1, 2L]

    return {
        "D": D, "H": H, "L": L, "Hp": Hp, "Cp": Cp, "Dp": Dp,
        "w1": _pad_to(params["w1"], (D, Hp)).astype(matmul_dtype),
        "b1": _pad_to(params["b1"], (1, Hp)).astype(jnp.float32),
        "wmv": _pad_to(wmv, (Hp, Cp)).astype(matmul_dtype),
        "bmv": _pad_to(bmv, (1, Cp)).astype(jnp.float32),
        "wd": _pad_to(params["wd"], (L, Hp)).astype(matmul_dtype),
        "bd": _pad_to(params["bd"], (1, Hp)).astype(jnp.float32),
        "wo": _pad_to(params["wo"], (Hp, Dp)).astype(matmul_dtype),
        "bo": _pad_to(params["bo"], (1, Dp)).astype(jnp.float32),
    }


def _pick_block_b(B):
    # Prefer >=2 grid steps with tiles <=256 rows: keeps both v7x TensorCores
    # busy, enables the x / output DMA pipeline, and keeps double-buffered f32
    # tiles well inside v5e's 16 MiB scoped-VMEM default at MNIST-scale dims.
    for tb in (256, 128, 64, 32, 16, 8):
        if B % tb == 0 and B // tb >= 2:
            return tb
    return B


def vae_forward(x, eps, prepared, *, block_b=None):
    """Fused VAE forward. x: [B, D] f32, eps: [B, L] f32 ~ N(0,1),
    prepared: output of prepare_params(). Returns (x_hat, mean, log_var)."""
    B, D = x.shape
    L = prepared["L"]
    Hp, Cp, Dp = prepared["Hp"], prepared["Cp"], prepared["Dp"]
    assert D == prepared["D"], "input dim mismatch"
    assert eps.shape == (B, L), "eps shape mismatch"

    if block_b is None:
        block_b = _pick_block_b(B)
    assert B % block_b == 0, "batch must be divisible by the batch tile"
    grid = (B // block_b,)
    W = D + 2 * L  # packed output width: [x_hat | mean | log_var]

    def row_spec(last):
        return pl.BlockSpec((block_b, last), lambda i: (i, 0))

    def res_spec(shape):  # weights/biases: resident across all grid steps
        return pl.BlockSpec(shape, lambda i: (0, 0))

    wbytes = sum(int(prepared[k].size) * prepared[k].dtype.itemsize
                 for k in ("w1", "b1", "wmv", "bmv", "wd", "bd", "wo", "bo"))
    cost = pl.CostEstimate(
        flops=2 * B * (D * Hp + Hp * Cp + L * Hp + Hp * Dp),
        transcendentals=B * (L + D),
        bytes_accessed=4 * B * (D + L + W) + wbytes,
    )

    out = pl.pallas_call(
        functools.partial(_vae_kernel, L, D),
        grid_spec=pltpu.PrefetchScalarGridSpec(
            num_scalar_prefetch=0,
            grid=grid,
            in_specs=[
                row_spec(D),            # x
                row_spec(L),            # eps
                res_spec((D, Hp)),      # w1
                res_spec((1, Hp)),      # b1
                res_spec((Hp, Cp)),     # wmv (fused mean|log_var weight)
                res_spec((1, Cp)),      # bmv
                res_spec((L, Hp)),      # wd
                res_spec((1, Hp)),      # bd
                res_spec((Hp, Dp)),     # wo
                res_spec((1, Dp)),      # bo
            ],
            out_specs=row_spec(W),
        ),
        out_shape=jax.ShapeDtypeStruct((B, W), jnp.float32),
        compiler_params=pltpu.CompilerParams(
            # batch tiles are independent -> shard grid steps across TensorCores
            dimension_semantics=("parallel",),
        ),
        cost_estimate=cost,
    )(x, eps,
      prepared["w1"], prepared["b1"], prepared["wmv"], prepared["bmv"],
      prepared["wd"], prepared["bd"], prepared["wo"], prepared["bo"])

    x_hat = out[:, :D]
    mean = out[:, D:D + L]
    log_var = out[:, D + L:]
    return x_hat, mean, log_var


def init_params(key, input_dim, hidden_dim, latent_dim):
    ks = jax.random.split(key, 10)

    def lin(kw, fan_in, fan_out):
        bound = 1.0 / jnp.sqrt(fan_in)
        return jax.random.uniform(kw, (fan_in, fan_out), jnp.float32, -bound, bound)

    return {
        "w1": lin(ks[0], input_dim, hidden_dim),
        "b1": jax.random.uniform(ks[1], (1, hidden_dim), jnp.float32, -0.1, 0.1),
        "wm": lin(ks[2], hidden_dim, latent_dim),
        "bm": jax.random.uniform(ks[3], (1, latent_dim), jnp.float32, -0.1, 0.1),
        "wv": lin(ks[4], hidden_dim, latent_dim),
        "bv": jax.random.uniform(ks[5], (1, latent_dim), jnp.float32, -0.1, 0.1),
        "wd": lin(ks[6], latent_dim, hidden_dim),
        "bd": jax.random.uniform(ks[7], (1, hidden_dim), jnp.float32, -0.1, 0.1),
        "wo": lin(ks[8], hidden_dim, input_dim),
        "bo": jax.random.uniform(ks[9], (1, input_dim), jnp.float32, -0.1, 0.1),
    }


if __name__ == "__main__":
    B, D, H, L = 8, 64, 32, 8   # batch, input_dim, hidden_dim, latent_dim

    key = jax.random.PRNGKey(0)
    k_x, k_e, k_p = jax.random.split(key, 3)
    x = jax.random.uniform(k_x, (B, D), jnp.float32)
    eps = jax.random.normal(k_e, (B, L), jnp.float32)
    params = init_params(k_p, D, H, L)

    prepared = prepare_params(params)  # f32 matmuls -> exact verification below
    x_hat, mean, log_var = vae_forward(x, eps, prepared)
    jax.block_until_ready((x_hat, mean, log_var))

    # --- full forward verified against a pure-JAX reference (same eps) ---
    h = jax.nn.relu(x @ params["w1"] + params["b1"])
    r_mean = h @ params["wm"] + params["bm"]
    r_lv = h @ params["wv"] + params["bv"]
    r_z = r_mean + jnp.exp(0.5 * r_lv) * eps
    hd = jax.nn.relu(r_z @ params["wd"] + params["bd"])
    r_xhat = jax.nn.sigmoid(hd @ params["wo"] + params["bo"])

    assert jnp.allclose(mean, r_mean, atol=1e-5), "mean mismatch"
    assert jnp.allclose(log_var, r_lv, atol=1e-5), "log_var mismatch"
    assert jnp.allclose(x_hat, r_xhat, atol=1e-5), "x_hat mismatch"
    assert jnp.all((x_hat >= 0.0) & (x_hat <= 1.0)), "x_hat out of range"
    assert jnp.all(jnp.isfinite(mean)) and jnp.all(jnp.isfinite(log_var))

    print("KERNEL_OK")
</pallas_src>

<mosaic_0001>
module attributes {stable_mosaic.version = 11 : i64} {
  func.func @_vae_kernel(%arg0: i32, %arg1: memref<8x64xf32, #tpu.memory_space<vmem>>, %arg2: memref<8x8xf32, #tpu.memory_space<vmem>>, %arg3: memref<64x128xf32, #tpu.memory_space<vmem>>, %arg4: memref<1x128xf32, #tpu.memory_space<vmem>>, %arg5: memref<128x128xf32, #tpu.memory_space<vmem>>, %arg6: memref<1x128xf32, #tpu.memory_space<vmem>>, %arg7: memref<8x128xf32, #tpu.memory_space<vmem>>, %arg8: memref<1x128xf32, #tpu.memory_space<vmem>>, %arg9: memref<128x128xf32, #tpu.memory_space<vmem>>, %arg10: memref<1x128xf32, #tpu.memory_space<vmem>>, %arg11: memref<8x80xf32, #tpu.memory_space<vmem>>) attributes {dimension_semantics = [#tpu.dimension_semantics<parallel>], iteration_bounds = array<i64: 1>, scalar_prefetch = 0 : i64, scratch_operands = 0 : i64, tpu.core_type = #tpu.core_type<tc>, window_params = [{transform_indices = @transform_0, window_bounds = array<i64: 8, 64>}, {transform_indices = @transform_1, window_bounds = array<i64: 8, 8>}, {pipeline_mode = #tpu.pipeline_mode<synchronous>, transform_indices = @transform_2, window_bounds = array<i64: 64, 128>}, {pipeline_mode = #tpu.pipeline_mode<synchronous>, transform_indices = @transform_3, window_bounds = array<i64: 1, 128>}, {pipeline_mode = #tpu.pipeline_mode<synchronous>, transform_indices = @transform_4, window_bounds = array<i64: 128, 128>}, {pipeline_mode = #tpu.pipeline_mode<synchronous>, transform_indices = @transform_5, window_bounds = array<i64: 1, 128>}, {pipeline_mode = #tpu.pipeline_mode<synchronous>, transform_indices = @transform_6, window_bounds = array<i64: 8, 128>}, {pipeline_mode = #tpu.pipeline_mode<synchronous>, transform_indices = @transform_7, window_bounds = array<i64: 1, 128>}, {pipeline_mode = #tpu.pipeline_mode<synchronous>, transform_indices = @transform_8, window_bounds = array<i64: 128, 128>}, {pipeline_mode = #tpu.pipeline_mode<synchronous>, transform_indices = @transform_9, window_bounds = array<i64: 1, 128>}, {transform_indices = @transform_10, window_bounds = array<i64: 8, 80>}]} {
    %c0 = arith.constant 0 : index
    %c0_0 = arith.constant 0 : index
    %0 = vector.load %arg1[%c0, %c0_0] : memref<8x64xf32, #tpu.memory_space<vmem>>, vector<8x64xf32>
    %c0_1 = arith.constant 0 : index
    %c0_2 = arith.constant 0 : index
    %1 = vector.load %arg3[%c0_1, %c0_2] : memref<64x128xf32, #tpu.memory_space<vmem>>, vector<64x128xf32>
    %cst = arith.constant dense<0.000000e+00> : vector<8x128xf32>
    %2 = tpu.matmul %0, %1, %cst {dimension_numbers = #tpu.dot_dimension_numbers<[1], [0], [0], [1], [0, 0, 1, 1], [], []>} : vector<8x64xf32>, vector<64x128xf32>, vector<8x128xf32> -> vector<8x128xf32>
    %c0_3 = arith.constant 0 : index
    %c0_4 = arith.constant 0 : index
    %3 = vector.load %arg4[%c0_3, %c0_4] : memref<1x128xf32, #tpu.memory_space<vmem>>, vector<1x128xf32>
    %4 = vector.broadcast %3 : vector<1x128xf32> to vector<8x128xf32>
    %5 = arith.addf %2, %4 : vector<8x128xf32>
    %cst_5 = arith.constant 0.000000e+00 : f32
    %6 = vector.broadcast %cst_5 : f32 to vector<8x128xf32>
    %7 = arith.maximumf %5, %6 : vector<8x128xf32>
    %c0_6 = arith.constant 0 : index
    %c0_7 = arith.constant 0 : index
    %8 = vector.load %arg5[%c0_6, %c0_7] : memref<128x128xf32, #tpu.memory_space<vmem>>, vector<128x128xf32>
    %cst_8 = arith.constant dense<0.000000e+00> : vector<8x128xf32>
    %9 = tpu.matmul %7, %8, %cst_8 {dimension_numbers = #tpu.dot_dimension_numbers<[1], [0], [0], [1], [0, 0, 1, 1], [], []>} : vector<8x128xf32>, vector<128x128xf32>, vector<8x128xf32> -> vector<8x128xf32>
    %c0_9 = arith.constant 0 : index
    %c0_10 = arith.constant 0 : index
    %10 = vector.load %arg6[%c0_9, %c0_10] : memref<1x128xf32, #tpu.memory_space<vmem>>, vector<1x128xf32>
    %11 = vector.broadcast %10 : vector<1x128xf32> to vector<8x128xf32>
    %12 = arith.addf %9, %11 : vector<8x128xf32>
    %13 = vector.extract_strided_slice %12 {offsets = [0, 0], sizes = [8, 8], strides = [1, 1]} : vector<8x128xf32> to vector<8x8xf32>
    %14 = vector.extract_strided_slice %12 {offsets = [0, 8], sizes = [8, 8], strides = [1, 1]} : vector<8x128xf32> to vector<8x8xf32>
    %cst_11 = arith.constant 5.000000e-01 : f32
    %15 = vector.broadcast %cst_11 : f32 to vector<8x8xf32>
    %16 = arith.mulf %15, %14 : vector<8x8xf32>
    %17 = math.exp %16 : vector<8x8xf32>
    %c0_12 = arith.constant 0 : index
    %c0_13 = arith.constant 0 : index
    %18 = vector.load %arg2[%c0_12, %c0_13] : memref<8x8xf32, #tpu.memory_space<vmem>>, vector<8x8xf32>
    %19 = arith.mulf %17, %18 : vector<8x8xf32>
    %20 = arith.addf %13, %19 : vector<8x8xf32>
    %c0_14 = arith.constant 0 : index
    %c0_15 = arith.constant 0 : index
    %21 = vector.load %arg7[%c0_14, %c0_15] : memref<8x128xf32, #tpu.memory_space<vmem>>, vector<8x128xf32>
    %cst_16 = arith.constant dense<0.000000e+00> : vector<8x128xf32>
    %22 = tpu.matmul %20, %21, %cst_16 {dimension_numbers = #tpu.dot_dimension_numbers<[1], [0], [0], [1], [0, 0, 1, 1], [], []>} : vector<8x8xf32>, vector<8x128xf32>, vector<8x128xf32> -> vector<8x128xf32>
    %c0_17 = arith.constant 0 : index
    %c0_18 = arith.constant 0 : index
    %23 = vector.load %arg8[%c0_17, %c0_18] : memref<1x128xf32, #tpu.memory_space<vmem>>, vector<1x128xf32>
    %24 = vector.broadcast %23 : vector<1x128xf32> to vector<8x128xf32>
    %25 = arith.addf %22, %24 : vector<8x128xf32>
    %cst_19 = arith.constant 0.000000e+00 : f32
    %26 = vector.broadcast %cst_19 : f32 to vector<8x128xf32>
    %27 = arith.maximumf %25, %26 : vector<8x128xf32>
    %c0_20 = arith.constant 0 : index
    %c0_21 = arith.constant 0 : index
    %28 = vector.load %arg9[%c0_20, %c0_21] : memref<128x128xf32, #tpu.memory_space<vmem>>, vector<128x128xf32>
    %cst_22 = arith.constant dense<0.000000e+00> : vector<8x128xf32>
    %29 = tpu.matmul %27, %28, %cst_22 {dimension_numbers = #tpu.dot_dimension_numbers<[1], [0], [0], [1], [0, 0, 1, 1], [], []>} : vector<8x128xf32>, vector<128x128xf32>, vector<8x128xf32> -> vector<8x128xf32>
    %c0_23 = arith.constant 0 : index
    %c0_24 = arith.constant 0 : index
    %30 = vector.load %arg10[%c0_23, %c0_24] : memref<1x128xf32, #tpu.memory_space<vmem>>, vector<1x128xf32>
    %31 = vector.broadcast %30 : vector<1x128xf32> to vector<8x128xf32>
    %32 = arith.addf %29, %31 : vector<8x128xf32>
    %33 = vector.extract_strided_slice %32 {offsets = [0, 0], sizes = [8, 64], strides = [1, 1]} : vector<8x128xf32> to vector<8x64xf32>
    %34 = arith.negf %33 : vector<8x64xf32>
    %35 = math.exp %34 : vector<8x64xf32>
    %cst_25 = arith.constant 1.000000e+00 : f32
    %36 = vector.broadcast %cst_25 : f32 to vector<8x64xf32>
    %37 = arith.addf %36, %35 : vector<8x64xf32>
    %38 = arith.divf %36, %37 : vector<8x64xf32>
    %39 = tpu.concatenate %38, %13, %14 in 1 : vector<8x64xf32>, vector<8x8xf32>, vector<8x8xf32> -> vector<8x80xf32>
    %c0_26 = arith.constant 0 : index
    %c0_27 = arith.constant 0 : index
    %40 = vector.load %arg11[%c0_26, %c0_27] : memref<8x80xf32, #tpu.memory_space<vmem>>, vector<8x80xf32>
    tpu.vector_store %arg11[%c0_26, %c0_27], %39 {strides = array<i32>} : memref<8x80xf32, #tpu.memory_space<vmem>>, vector<8x80xf32>,
    return
  }
  func.func @transform_0(%arg0: i32) -> (i32, i32) {
    %c0_i32 = arith.constant 0 : i32
    %c0_i32_0 = arith.constant 0 : i32
    return %arg0, %c0_i32 : i32, i32
  }
  func.func @transform_1(%arg0: i32) -> (i32, i32) {
    %c0_i32 = arith.constant 0 : i32
    %c0_i32_0 = arith.constant 0 : i32
    return %arg0, %c0_i32 : i32, i32
  }
  func.func @transform_2(%arg0: i32) -> (i32, i32) {
    %c0_i32 = arith.constant 0 : i32
    %c0_i32_0 = arith.constant 0 : i32
    %c0_i32_1 = arith.constant 0 : i32
    return %c0_i32, %c0_i32_0 : i32, i32
  }
  func.func @transform_3(%arg0: i32) -> (i32, i32) {
    %c0_i32 = arith.constant 0 : i32
    %c0_i32_0 = arith.constant 0 : i32
    %c0_i32_1 = arith.constant 0 : i32
    return %c0_i32, %c0_i32_0 : i32, i32
  }
  func.func @transform_4(%arg0: i32) -> (i32, i32) {
    %c0_i32 = arith.constant 0 : i32
    %c0_i32_0 = arith.constant 0 : i32
    %c0_i32_1 = arith.constant 0 : i32
    return %c0_i32, %c0_i32_0 : i32, i32
  }
  func.func @transform_5(%arg0: i32) -> (i32, i32) {
    %c0_i32 = arith.constant 0 : i32
    %c0_i32_0 = arith.constant 0 : i32
    %c0_i32_1 = arith.constant 0 : i32
    return %c0_i32, %c0_i32_0 : i32, i32
  }
  func.func @transform_6(%arg0: i32) -> (i32, i32) {
    %c0_i32 = arith.constant 0 : i32
    %c0_i32_0 = arith.constant 0 : i32
    %c0_i32_1 = arith.constant 0 : i32
    return %c0_i32, %c0_i32_0 : i32, i32
  }
  func.func @transform_7(%arg0: i32) -> (i32, i32) {
    %c0_i32 = arith.constant 0 : i32
    %c0_i32_0 = arith.constant 0 : i32
    %c0_i32_1 = arith.constant 0 : i32
    return %c0_i32, %c0_i32_0 : i32, i32
  }
  func.func @transform_8(%arg0: i32) -> (i32, i32) {
    %c0_i32 = arith.constant 0 : i32
    %c0_i32_0 = arith.constant 0 : i32
    %c0_i32_1 = arith.constant 0 : i32
    return %c0_i32, %c0_i32_0 : i32, i32
  }
  func.func @transform_9(%arg0: i32) -> (i32, i32) {
    %c0_i32 = arith.constant 0 : i32
    %c0_i32_0 = arith.constant 0 : i32
    %c0_i32_1 = arith.constant 0 : i32
    return %c0_i32, %c0_i32_0 : i32, i32
  }
  func.func @transform_10(%arg0: i32) -> (i32, i32) {
    %c0_i32 = arith.constant 0 : i32
    %c0_i32_0 = arith.constant 0 : i32
    return %arg0, %c0_i32 : i32, i32
  }
}

</mosaic_0001>

<llo_original>
// kernel: tpu_custom_call.1
$region0: #{tpu_custom_call.1}
  #allocation0 [shape = 'u32[]', space=smem, size = 0x4, offset = 0x4, fixed_abs, tag = 'smem constant byte address 0x4 - core index']
  #allocation1 [shape = 'u32[72,128]{1,0:T(1,128)}', space=vmem, size = 0x9000, scoped, tag = 'internal scratch']
  %s0 = inlined_call_operand.hbm [shape: f32[8,64], index: 0, kind: input, shape index: {}]
  %s1 = inlined_call_operand.hbm [shape: f32[8,8], index: 1, kind: input, shape index: {}]
  %s2 = inlined_call_operand.hbm [shape: f32[64,128], index: 2, kind: input, shape index: {}]
  %s3 = inlined_call_operand.vmem [shape: f32[1,128], index: 3, kind: input, shape index: {}]
  %s4 = inlined_call_operand.hbm [shape: f32[128,128], index: 4, kind: input, shape index: {}]
  %s5 = inlined_call_operand.vmem [shape: f32[1,128], index: 5, kind: input, shape index: {}]
  %s6 = inlined_call_operand.hbm [shape: f32[8,128], index: 6, kind: input, shape index: {}]
  %s7 = inlined_call_operand.vmem [shape: f32[1,128], index: 7, kind: input, shape index: {}]
  %s8 = inlined_call_operand.hbm [shape: f32[128,128], index: 8, kind: input, shape index: {}]
  %s9 = inlined_call_operand.vmem [shape: f32[1,128], index: 9, kind: input, shape index: {}]
  %s10 = inlined_call_operand.hbm [shape: f32[8,80], index: 10, kind: output, shape index: {}]
  %s11 = sld [smem:[#allocation0]]
  $region74: #{tpu_custom_call.1} parent=0
    _
  %s13 = ssub.s32 1, %s11
  %s14 = scalar_select 0, %s13, %s11
  $region1: #{tpu_custom_call.1} parent=0
    #allocation2 [shape = 'u8[4096]{0}', space=vmem, size = 0x1000, scoped, tag = 'input window, operand 0, single buffered']
    #allocation3 [shape = 's32[1]{0}', space=sflag, size = 0x4, scoped, tag = 'scoped memory for tpu_custom_call.1']
    #allocation4 [shape = 's32[1]{0}', space=sflag, size = 0x4, scoped, tag = 'scoped memory for tpu_custom_call.1']
    #allocation5 [shape = 'u8[4096]{0}', space=vmem, size = 0x1000, scoped, tag = 'input window, operand 1, single buffered']
    #allocation6 [shape = 's32[1]{0}', space=sflag, size = 0x4, scoped, tag = 'scoped memory for tpu_custom_call.1']
    #allocation7 [shape = 'u8[32768]{0}', space=vmem, size = 0x8000, scoped, tag = 'input window, operand 2, single buffered']
    #allocation8 [shape = 'u8[65536]{0}', space=vmem, size = 0x10000, scoped, tag = 'input window, operand 4, single buffered']
    #allocation9 [shape = 's32[1]{0}', space=sflag, size = 0x4, scoped, tag = 'scoped memory for tpu_custom_call.1']
    #allocation10 [shape = 'u8[4096]{0}', space=vmem, size = 0x1000, scoped, tag = 'input window, operand 6, single buffered']
    #allocation11 [shape = 'u8[65536]{0}', space=vmem, size = 0x10000, scoped, tag = 'input window, operand 8, single buffered']
    #allocation12 [shape = 's32[1]{0}', space=sflag, size = 0x4, scoped, tag = 'scoped memory for tpu_custom_call.1']
    #allocation13 [shape = 'u8[4096]{0}', space=vmem, size = 0x1000, scoped, tag = 'output window, operand 0, single buffered']
    %15 = vsyncpa [#allocation3], 0
    %16 = vsyncpa [#allocation6], 0
    %17 = vsyncpa [#allocation9], 0
    %18 = vsyncpa [#allocation12], 0
    %19 = vsyncpa [#allocation4], 0
    // Predicated region
    $region2: #{tpu_custom_call.1} parent=1 // pred_check
      _
    $region3: #{tpu_custom_call.1} parent=1 // pred_check_branch
      %21 = sbr.rel (0) target = $region5
    $region4: #{tpu_custom_call.1} parent=1 // pred_region
      %23 = vsyncadd [#allocation3], 0
      %s25 = sshll.u32 %s0, 4
      %s26 = int_to_ptr.hbm [resolvable:$true] %s25
      %s27 = sshll.u32 [#allocation2], 4
      %s28 = int_to_ptr.vmem [resolvable:$true] %s27
      %30 = dma.hbm_to_vmem [thread:$0]  %s26, 128, %s28, [#allocation3]
    $region5: #{tpu_custom_call.1} parent=1 // pred_fallthru
      _
    // Predicated region
    $region6: #{tpu_custom_call.1} parent=1 // pred_check
      _
    $region7: #{tpu_custom_call.1} parent=1 // pred_check_branch
      %32 = sbr.rel (0) target = $region9
    $region8: #{tpu_custom_call.1} parent=1 // pred_region
      %34 = vsyncadd [#allocation6], 0
      %s36 = sshll.u32 %s1, 4
      %s37 = int_to_ptr.hbm [resolvable:$true] %s36
      %s38 = sshll.u32 [#allocation5], 4
      %s39 = int_to_ptr.vmem [resolvable:$true] %s38
      %41 = dma.hbm_to_vmem [thread:$0]  %s37, 128, %s39, [#allocation6]
    $region9: #{tpu_custom_call.1} parent=1 // pred_fallthru
      _
    // Predicated region
    $region10: #{tpu_custom_call.1} parent=1 // pred_check
      _
    $region11: #{tpu_custom_call.1} parent=1 // pred_check_branch
      %43 = sbr.rel (0) target = $region13
    $region12: #{tpu_custom_call.1} parent=1 // pred_region
      %45 = vsyncadd [#allocation6], 0
      %s46 = sshll.u32 %s2, 4
      %s47 = int_to_ptr.hbm [resolvable:$true] %s46
      %s48 = sshll.u32 [#allocation7], 4
      %s49 = int_to_ptr.vmem [resolvable:$true] %s48
      %54 = dma.hbm_to_vmem [thread:$0]  %s47, 1024, %s49, [#allocation6], 128, 128, 8
    $region13: #{tpu_custom_call.1} parent=1 // pred_fallthru
      _
    // Predicated region
    $region14: #{tpu_custom_call.1} parent=1 // pred_check
      _
    $region15: #{tpu_custom_call.1} parent=1 // pred_check_branch
      %56 = sbr.rel (0) target = $region17
    $region16: #{tpu_custom_call.1} parent=1 // pred_region
      _
    $region17: #{tpu_custom_call.1} parent=1 // pred_fallthru
      _
    // Predicated region
    $region18: #{tpu_custom_call.1} parent=1 // pred_check
      _
    $region19: #{tpu_custom_call.1} parent=1 // pred_check_branch
      %58 = sbr.rel (0) target = $region21
    $region20: #{tpu_custom_call.1} parent=1 // pred_region
      %60 = vsyncadd [#allocation9], 0
      %s61 = sshll.u32 %s4, 4
      %s62 = int_to_ptr.hbm [resolvable:$true] %s61
      %s63 = sshll.u32 [#allocation8], 4
      %s64 = int_to_ptr.vmem [resolvable:$true] %s63
      %69 = dma.hbm_to_vmem [thread:$0]  %s62, 2048, %s64, [#allocation9], 128, 128, 8
    $region21: #{tpu_custom_call.1} parent=1 // pred_fallthru
      _
    // Predicated region
    $region22: #{tpu_custom_call.1} parent=1 // pred_check
      _
    $region23: #{tpu_custom_call.1} parent=1 // pred_check_branch
      %71 = sbr.rel (0) target = $region25
    $region24: #{tpu_custom_call.1} parent=1 // pred_region
      _
    $region25: #{tpu_custom_call.1} parent=1 // pred_fallthru
      _
    // Predicated region
    $region26: #{tpu_custom_call.1} parent=1 // pred_check
      _
    $region27: #{tpu_custom_call.1} parent=1 // pred_check_branch
      %73 = sbr.rel (0) target = $region29
    $region28: #{tpu_custom_call.1} parent=1 // pred_region
      %75 = vsyncadd [#allocation9], 0
      %s77 = sshll.u32 %s6, 4
      %s78 = int_to_ptr.hbm [resolvable:$true] %s77
      %s79 = sshll.u32 [#allocation10], 4
      %s80 = int_to_ptr.vmem [resolvable:$true] %s79
      %82 = dma.hbm_to_vmem [thread:$0]  %s78, 128, %s80, [#allocation9]
    $region29: #{tpu_custom_call.1} parent=1 // pred_fallthru
      _
    // Predicated region
    $region30: #{tpu_custom_call.1} parent=1 // pred_check
      _
    $region31: #{tpu_custom_call.1} parent=1 // pred_check_branch
      %84 = sbr.rel (0) target = $region33
    $region32: #{tpu_custom_call.1} parent=1 // pred_region
      _
    $region33: #{tpu_custom_call.1} parent=1 // pred_fallthru
      _
    // Predicated region
    $region34: #{tpu_custom_call.1} parent=1 // pred_check
      _
    $region35: #{tpu_custom_call.1} parent=1 // pred_check_branch
      %86 = sbr.rel (0) target = $region37
    $region36: #{tpu_custom_call.1} parent=1 // pred_region
      %88 = vsyncadd [#allocation12], 0
      %s89 = sshll.u32 %s8, 4
      %s90 = int_to_ptr.hbm [resolvable:$true] %s89
      %s91 = sshll.u32 [#allocation11], 4
      %s92 = int_to_ptr.vmem [resolvable:$true] %s91
      %97 = dma.hbm_to_vmem [thread:$0]  %s90, 2048, %s92, [#allocation12], 128, 128, 8
    $region37: #{tpu_custom_call.1} parent=1 // pred_fallthru
      _
    // Predicated region
    $region38: #{tpu_custom_call.1} parent=1 // pred_check
      _
    $region39: #{tpu_custom_call.1} parent=1 // pred_check_branch
      %99 = sbr.rel (0) target = $region41
    $region40: #{tpu_custom_call.1} parent=1 // pred_region
      _
    $region41: #{tpu_custom_call.1} parent=1 // pred_fallthru
      _
    // Predicated region
    $region42: #{tpu_custom_call.1} parent=1 // pred_check
      _
    $region43: #{tpu_custom_call.1} parent=1 // pred_check_branch
      %101 = sbr.rel (0) target = $region45
    $region44: #{tpu_custom_call.1} parent=1 // pred_region
      %103 = dma.done [#allocation3], 128
    $region45: #{tpu_custom_call.1} parent=1 // pred_fallthru
      _
    // Predicated region
    $region46: #{tpu_custom_call.1} parent=1 // pred_check
      _
    $region47: #{tpu_custom_call.1} parent=1 // pred_check_branch
      %105 = sbr.rel (0) target = $region49
    $region48: #{tpu_custom_call.1} parent=1 // pred_region
      %107 = dma.done [#allocation6], 128
    $region49: #{tpu_custom_call.1} parent=1 // pred_fallthru
      _
    // Predicated region
    $region50: #{tpu_custom_call.1} parent=1 // pred_check
      _
    $region51: #{tpu_custom_call.1} parent=1 // pred_check_branch
      %109 = sbr.rel (0) target = $region53
    $region52: #{tpu_custom_call.1} parent=1 // pred_region
      %111 = dma.done [#allocation6], 1024
    $region53: #{tpu_custom_call.1} parent=1 // pred_fallthru
      _
    // Predicated region
    $region54: #{tpu_custom_call.1} parent=1 // pred_check
      _
    $region55: #{tpu_custom_call.1} parent=1 // pred_check_branch
      %113 = sbr.rel (0) target = $region57
    $region56: #{tpu_custom_call.1} parent=1 // pred_region
      %115 = dma.done [#allocation9], 2048
    $region57: #{tpu_custom_call.1} parent=1 // pred_fallthru
      _
    // Predicated region
    $region58: #{tpu_custom_call.1} parent=1 // pred_check
      _
    $region59: #{tpu_custom_call.1} parent=1 // pred_check_branch
      %117 = sbr.rel (0) target = $region61
    $region60: #{tpu_custom_call.1} parent=1 // pred_region
      %119 = dma.done [#allocation9], 128
    $region61: #{tpu_custom_call.1} parent=1 // pred_fallthru
      _
    // Predicated region
    $region62: #{tpu_custom_call.1} parent=1 // pred_check
      _
    $region63: #{tpu_custom_call.1} parent=1 // pred_check_branch
      %121 = sbr.rel (0) target = $region65
    $region64: #{tpu_custom_call.1} parent=1 // pred_region
      %123 = dma.done [#allocation12], 2048
    $region65: #{tpu_custom_call.1} parent=1 // pred_fallthru
      _
    %v124 = vld [vmem:[#allocation2] sm:$0xff]
    %v125 = vld [vmem:[#allocation7] sm:$0xff]
    %v126 = vld [vmem:[#allocation7 + $0x8] sm:$0xff]
    %v127 = vld [vmem:[#allocation7 + $0x10] sm:$0xff]
    %v128 = vld [vmem:[#allocation7 + $0x18] sm:$0xff]
    %v129 = vld [vmem:[#allocation7 + $0x20] sm:$0xff]
    %v130 = vld [vmem:[#allocation7 + $0x28] sm:$0xff]
    %v131 = vld [vmem:[#allocation7 + $0x30] sm:$0xff]
    %v132 = vld [vmem:[#allocation7 + $0x38] sm:$0xff]
    %v133 = vld [vmem:[%s3] sm:$0x1]
    %v135 = vperm.slane %v133, 0
    %vm137 = vcmask 523264
    %v139 = vsel %vm137, %v124, 0
    %141 = vmatpush.msra.mxu0 0.0
    %142 = vmatpush.msra.mxu0 0.0
    %143 = vmatpush.msra.mxu0 0.0
    %144 = vmatpush.msra.mxu0 0.0
    %145 = vmatpush.msra.mxu0 0.0
    %146 = vmatpush.msra.mxu0 0.0
    %147 = vmatpush.msra.mxu0 0.0
    %148 = vmatpush.msra.mxu0 0.0
    %149 = vmatpush.msra.mxu0 %v132
    %150 = vmatpush.msra.mxu0 %v131
    %151 = vmatpush.msra.mxu0 %v130
    %152 = vmatpush.msra.mxu0 %v129
    %153 = vmatpush.msra.mxu0 %v128
    %154 = vmatpush.msra.mxu0 %v127
    %155 = vmatpush.msra.mxu0 %v126
    %156 = vmatpush.msra.mxu0 %v125
    %157 = vmatmul.f32.gmra.mxu0 %v139
    %v158 = vpop.f32.mrf.mxu0
    %v159 = vadd.f32 %v135, %v158
    %160 = vdwg.mxu0
    %v161 = vmax.f32 %v159, 0.0
    %v162 = vld [vmem:[#allocation8] sm:$0xff]
    %v163 = vld [vmem:[#allocation8 + $0x8] sm:$0xff]
    %v164 = vld [vmem:[#allocation8 + $0x10] sm:$0xff]
    %v165 = vld [vmem:[#allocation8 + $0x18] sm:$0xff]
    %v166 = vld [vmem:[#allocation8 + $0x20] sm:$0xff]
    %v167 = vld [vmem:[#allocation8 + $0x28] sm:$0xff]
    %v168 = vld [vmem:[#allocation8 + $0x30] sm:$0xff]
    %v169 = vld [vmem:[#allocation8 + $0x38] sm:$0xff]
    %v170 = vld [vmem:[#allocation8 + $0x40] sm:$0xff]
    %v171 = vld [vmem:[#allocation8 + $0x48] sm:$0xff]
    %v172 = vld [vmem:[#allocation8 + $0x50] sm:$0xff]
    %v173 = vld [vmem:[#allocation8 + $0x58] sm:$0xff]
    %v174 = vld [vmem:[#allocation8 + $0x60] sm:$0xff]
    %v175 = vld [vmem:[#allocation8 + $0x68] sm:$0xff]
    %v176 = vld [vmem:[#allocation8 + $0x70] sm:$0xff]
    %v177 = vld [vmem:[#allocation8 + $0x78] sm:$0xff]
    %v178 = vld [vmem:[%s5] sm:$0x1]
    %v180 = vperm.slane %v178, 0
    %182 = vmatpush.msra.mxu0 %v177
    %183 = vmatpush.msra.mxu0 %v176
    %184 = vmatpush.msra.mxu0 %v175
    %185 = vmatpush.msra.mxu0 %v174
    %186 = vmatpush.msra.mxu0 %v173
    %187 = vmatpush.msra.mxu0 %v172
    %188 = vmatpush.msra.mxu0 %v171
    %189 = vmatpush.msra.mxu0 %v170
    %190 = vmatpush.msra.mxu0 %v169
    %191 = vmatpush.msra.mxu0 %v168
    %192 = vmatpush.msra.mxu0 %v167
    %193 = vmatpush.msra.mxu0 %v166
    %194 = vmatpush.msra.mxu0 %v165
    %195 = vmatpush.msra.mxu0 %v164
    %196 = vmatpush.msra.mxu0 %v163
    %197 = vmatpush.msra.mxu0 %v162
    %198 = vmatmul.f32.gmra.mxu0 %v161
    %v199 = vpop.f32.mrf.mxu0
    %v200 = vadd.f32 %v180, %v199
    %201 = vdwg.mxu0
    %v202 = vmul.f32 %v200, 0.5
    %v203 = vmul.f32 %v202, 1.442695
    %v204 = vpow.pop %v203
    %v205 = vld [vmem:[#allocation5] sm:$0xff]
    %207 = vrot.lane.b32.xlu0 %v205, 8
    %v208 = vpop.permute.xlu0 %207
    %v210 = vmul.f32 %v204, %v208
    %212 = vrot.lane.b32.xlu0 %v210, 120
    %v213 = vpop.permute.xlu0 %212
    %v215 = vadd.f32 %v200, %v213
    %v216 = vld [vmem:[#allocation10] sm:$0xff]
    %v217 = vld [vmem:[%s7] sm:$0x1]
    %v219 = vperm.slane %v217, 0
    %vm221 = vcmask 64512
    %v223 = vsel %vm221, %v215, 0
    %225 = vmatpush.msra.mxu0 0.0
    %226 = vmatpush.msra.mxu0 0.0
    %227 = vmatpush.msra.mxu0 0.0
    %228 = vmatpush.msra.mxu0 0.0
    %229 = vmatpush.msra.mxu0 0.0
    %230 = vmatpush.msra.mxu0 0.0
    %231 = vmatpush.msra.mxu0 0.0
    %232 = vmatpush.msra.mxu0 0.0
    %233 = vmatpush.msra.mxu0 0.0
    %234 = vmatpush.msra.mxu0 0.0
    %235 = vmatpush.msra.mxu0 0.0
    %236 = vmatpush.msra.mxu0 0.0
    %237 = vmatpush.msra.mxu0 0.0
    %238 = vmatpush.msra.mxu0 0.0
    %239 = vmatpush.msra.mxu0 0.0
    %240 = vmatpush.msra.mxu0 %v216
    %241 = vmatmul.f32.gmra.mxu0 %v223
    %v242 = vpop.f32.mrf.mxu0
    %v243 = vadd.f32 %v219, %v242
    %244 = vdwg.mxu0
    %v245 = vmax.f32 %v243, 0.0
    %v246 = vld [vmem:[#allocation11] sm:$0xff]
    %v247 = vld [vmem:[#allocation11 + $0x8] sm:$0xff]
    %v248 = vld [vmem:[#allocation11 + $0x10] sm:$0xff]
    %v249 = vld [vmem:[#allocation11 + $0x18] sm:$0xff]
    %v250 = vld [vmem:[#allocation11 + $0x20] sm:$0xff]
    %v251 = vld [vmem:[#allocation11 + $0x28] sm:$0xff]
    %v252 = vld [vmem:[#allocation11 + $0x30] sm:$0xff]
    %v253 = vld [vmem:[#allocation11 + $0x38] sm:$0xff]
    %v254 = vld [vmem:[#allocation11 + $0x40] sm:$0xff]
    %v255 = vld [vmem:[#allocation11 + $0x48] sm:$0xff]
    %v256 = vld [vmem:[#allocation11 + $0x50] sm:$0xff]
    %v257 = vld [vmem:[#allocation11 + $0x58] sm:$0xff]
    %v258 = vld [vmem:[#allocation11 + $0x60] sm:$0xff]
    %v259 = vld [vmem:[#allocation11 + $0x68] sm:$0xff]
    %v260 = vld [vmem:[#allocation11 + $0x70] sm:$0xff]
    %v261 = vld [vmem:[#allocation11 + $0x78] sm:$0xff]
    %v262 = vld [vmem:[%s9] sm:$0x1]
    %v264 = vperm.slane %v262, 0
    %266 = vmatpush.msra.mxu0 %v261
    %267 = vmatpush.msra.mxu0 %v260
    %268 = vmatpush.msra.mxu0 %v259
    %269 = vmatpush.msra.mxu0 %v258
    %270 = vmatpush.msra.mxu0 %v257
    %271 = vmatpush.msra.mxu0 %v256
    %272 = vmatpush.msra.mxu0 %v255
    %273 = vmatpush.msra.mxu0 %v254
    %274 = vmatpush.msra.mxu0 %v253
    %275 = vmatpush.msra.mxu0 %v252
    %276 = vmatpush.msra.mxu0 %v251
    %277 = vmatpush.msra.mxu0 %v250
    %278 = vmatpush.msra.mxu0 %v249
    %279 = vmatpush.msra.mxu0 %v248
    %280 = vmatpush.msra.mxu0 %v247
    %281 = vmatpush.msra.mxu0 %v246
    %282 = vmatmul.f32.gmra.mxu0 %v245
    %v283 = vpop.f32.mrf.mxu0
    %v284 = vadd.f32 %v264, %v283
    %285 = vdwg.mxu0
    %v286 = vxor.u32 %v284, 2147483648
    %v287 = vmul.f32 %v286, 1.442695
    %v288 = vpow.pop %v287
    %v289 = vadd.f32 %v288, 1.0
    %v290 = vrcp.pop %v289
    %v291 = vmul.f32 %v289, %v290
    %v292 = vsub.f32 1.0, %v291
    %v293 = vmul.f32 %v290, %v292
    %v294 = vadd.f32 %v290, %v293
    %vm295 = vweird.f32 %v289
    %vm296 = vweird.f32 %v290
    %vm297 = vmor %vm295, %vm296
    %v298 = vsel %vm297, %v290, %v294
    %v299 = vand.u32 2147483647, %v289
    %vm300 = vcmp.eq.f32.partialorder %v299, 8.507059e+37
    %v301 = vand.u32 %v289, 2147483648
    %v302 = vor.u32 1.1754944e-38, %v301
    %v303 = vsel %vm300, %v302, %v298
    %v304 = vmul.f32 1.0, %v303
    %306 = vrot.lane.b32.xlu0 %v200, 64
    %v307 = vpop.permute.xlu0 %306
    %v309 = vsel %vm137, %v304, %v307
    %vm310 = vcmask 588800
    %v311 = vsel %vm310, %v309, %v307
    %vm312 = vcmask 654336
    %313 = vst.msk [vmem:[#allocation13] sm:$0xff] %vm312, %v311
    // Predicated region
    $region66: #{tpu_custom_call.1} parent=1 // pred_check
      _
    $region67: #{tpu_custom_call.1} parent=1 // pred_check_branch
      %315 = sbr.rel (0) target = $region69
    $region68: #{tpu_custom_call.1} parent=1 // pred_region
      %317 = vsyncadd [#allocation4], 0
      %s319 = sshll.u32 [#allocation13], 4
      %s320 = int_to_ptr.vmem [resolvable:$true] %s319
      %s321 = sshll.u32 %s10, 4
      %s322 = int_to_ptr.hbm [resolvable:$true] %s321
      %324 = dma.vmem_to_hbm [thread:$0]  %s320, 128, %s322, [#allocation4]
    $region69: #{tpu_custom_call.1} parent=1 // pred_fallthru
      _
    // Predicated region
    $region70: #{tpu_custom_call.1} parent=1 // pred_check
      _
    $region71: #{tpu_custom_call.1} parent=1 // pred_check_branch
      %326 = sbr.rel (0) target = $region73
    $region72: #{tpu_custom_call.1} parent=1 // pred_region
      %328 = dma.done [#allocation4], 128
    $region73: #{tpu_custom_call.1} parent=1 // pred_fallthru
      _
    %329 = vsyncpa [#allocation3], 1
    %330 = vsyncpa [#allocation6], 1
    %331 = vsyncpa [#allocation9], 1
    %332 = vsyncpa [#allocation12], 1
    %333 = vsyncpa [#allocation4], 1

</llo_original>
